<compile_context>
chip_gen: v5e
topology: v5e:2x2
jax: 0.10.0
libtpu: 0.0.40
codegen_flags: <defaults>
</compile_context>

<pallas_src>
import jax
import jax.numpy as jnp
from jax.experimental import pallas as pl
from jax.experimental.pallas import tpu as pltpu


def _make_patch_embed_kernel(p, Wp, E):
    """Kernel for one (n*Dp, hp) grid step: Wp patches -> (Wp, E) embeddings."""

    def kernel(x_ref, w_ref, b_ref, o_ref):
        # x_ref: (1, p, 1, p*Wp, p)  -> [ndp-blk, kd, hp-blk, kh*Wp + wp, kw]  (f32)
        # w_ref: (p, p, p, E)        -> [kd, kh, kw, e]                        (bf16)
        # b_ref: (1, E)                                                        (f32)
        # o_ref: (1, 1, Wp, E)
        acc = jnp.zeros((Wp, E), dtype=jnp.float32)
        # In-kernel patch flatten: for every (kd, kh) tap-plane the Wp patches
        # of this (n, dp, hp) row sit on contiguous sublanes, so a static
        # slice yields the (Wp, p) LHS directly -- no relayout / transpose.
        for kd in range(p):
            for kh in range(p):
                lhs = x_ref[0, kd, 0, kh * Wp:(kh + 1) * Wp, :]          # (Wp, p)
                rhs = w_ref[kd, kh]                                      # (p, E)
                acc = acc + jnp.dot(lhs.astype(jnp.bfloat16), rhs,
                                    preferred_element_type=jnp.float32)
        o_ref[0, 0, :, :] = (acc + b_ref[...]).astype(o_ref.dtype)

    return kernel


def patch_embed_3d(x, weight, bias, patch_size):
    """
    x      : (N, 1, D, H, W)   (PyTorch NCDHW, in_chans == 1)
    weight : (E, 1, p, p, p)   (PyTorch Conv3d weight layout)
    bias   : (E,)
    returns: (N, n_patches, E) with n_patches = (D/p)*(H/p)*(W/p)
    """
    N, C, D, H, W = x.shape
    assert C == 1, "PatchEmbed3D uses in_chans == 1"
    p = patch_size
    E = weight.shape[0]
    assert D % p == 0 and H % p == 0 and W % p == 0
    Dp, Hp, Wp = D // p, H // p, W // p
    n_patches = Dp * Hp * Wp

    # Contiguity-preserving view (pure bitcast, no HBM traffic):
    #   (N,1,D,H,W) -> (N*Dp, p, Hp, p*Wp, p) = [ndp, kd, hp, kh*Wp+wp, kw]
    xr = x.reshape(N * Dp, p, Hp, p * Wp, p)
    # Conv3d weight (E,1,p,p,p) -> (p,p,p,E), bf16 (tiny, one-off).
    w4 = jnp.transpose(weight.reshape(E, p, p, p), (1, 2, 3, 0)).astype(jnp.bfloat16)
    b2 = bias.reshape(1, E).astype(jnp.float32)

    M = N * n_patches
    K = p * p * p
    cost = pl.CostEstimate(
        flops=2 * M * K * E,
        transcendentals=0,
        bytes_accessed=(x.size * x.dtype.itemsize          # x read exactly once
                        + w4.size * w4.dtype.itemsize
                        + b2.size * b2.dtype.itemsize
                        + M * E * x.dtype.itemsize))       # output write

    out = pl.pallas_call(
        _make_patch_embed_kernel(p, Wp, E),
        out_shape=jax.ShapeDtypeStruct((N * Dp, Hp, Wp, E), x.dtype),
        grid_spec=pl.GridSpec(
            grid=(N * Dp, Hp),
            in_specs=[
                # last two block dims equal the full array dims -> always legal
                pl.BlockSpec((1, p, 1, p * Wp, p), lambda i, j: (i, 0, j, 0, 0)),
                pl.BlockSpec((p, p, p, E), lambda i, j: (0, 0, 0, 0)),
                pl.BlockSpec((1, E), lambda i, j: (0, 0)),
            ],
            out_specs=pl.BlockSpec((1, 1, Wp, E), lambda i, j: (i, j, 0, 0)),
        ),
        compiler_params=pltpu.CompilerParams(
            dimension_semantics=("parallel", "parallel")),
        cost_estimate=cost,
    )(xr, w4, b2)

    # (N*Dp, Hp, Wp, E) -> (N, Dp*Hp*Wp, E): contiguous, free.
    return out.reshape(N, n_patches, E)


if __name__ == "__main__":
    key = jax.random.PRNGKey(0)

    # Small shapes consistent with the module: img_size=(8,16,16), patch=4, E=32
    N = 2
    img_size = (8, 16, 16)
    patch = 4
    embed_dim = 32

    k_x, k_w, k_b = jax.random.split(key, 3)
    x = jax.random.normal(k_x, (N, 1, *img_size), dtype=jnp.float32)

    # Deterministic Conv3d-style parameter init (nn.Conv3d(1, E, p, stride=p)).
    fan_in = 1 * patch * patch * patch
    bound = 1.0 / (fan_in ** 0.5)
    weight = jax.random.uniform(k_w, (embed_dim, 1, patch, patch, patch),
                                dtype=jnp.float32, minval=-bound, maxval=bound)
    bias = jax.random.uniform(k_b, (embed_dim,), dtype=jnp.float32,
                              minval=-bound, maxval=bound)

    out = patch_embed_3d(x, weight, bias, patch)
    out = jax.block_until_ready(out)

    # Reference: lax conv with stride == kernel (same semantics as nn.Conv3d).
    ref = jax.lax.conv_general_dilated(
        x, weight, window_strides=(patch, patch, patch), padding="VALID",
        dimension_numbers=("NCDHW", "OIDHW", "NCDHW"),
        precision=jax.lax.Precision.HIGHEST)
    ref = ref + bias[None, :, None, None, None]
    ref = ref.reshape(N, embed_dim, -1).transpose(0, 2, 1)

    n_patches = (img_size[0] // patch) * (img_size[1] // patch) * (img_size[2] // patch)
    assert out.shape == (N, n_patches, embed_dim)
    # bf16 MXU operands (f32 accumulation) -> ~1e-2-level differences vs f32 ref.
    max_err = float(jnp.max(jnp.abs(out - ref)))
    assert jnp.allclose(out, ref, atol=3e-2, rtol=3e-2), max_err
    print("KERNEL_OK")
</pallas_src>

<mosaic_0001>
module attributes {stable_mosaic.version = 11 : i64} {
  func.func @kernel(%arg0: i32, %arg1: i32, %arg2: memref<1x4x1x16x4xf32, #tpu.memory_space<vmem>>, %arg3: memref<4x4x4x32xbf16, #tpu.memory_space<vmem>>, %arg4: memref<1x32xf32, #tpu.memory_space<vmem>>, %arg5: memref<1x1x4x32xf32, #tpu.memory_space<vmem>>) attributes {dimension_semantics = [#tpu.dimension_semantics<parallel>, #tpu.dimension_semantics<parallel>], iteration_bounds = array<i64: 4, 4>, scalar_prefetch = 0 : i64, scratch_operands = 0 : i64, tpu.core_type = #tpu.core_type<tc>, window_params = [{transform_indices = @transform_0, window_bounds = array<i64: 1, 4, 1, 16, 4>}, {pipeline_mode = #tpu.pipeline_mode<synchronous>, transform_indices = @transform_1, window_bounds = array<i64: 4, 4, 4, 32>}, {pipeline_mode = #tpu.pipeline_mode<synchronous>, transform_indices = @transform_2, window_bounds = array<i64: 1, 32>}, {transform_indices = @transform_3, window_bounds = array<i64: 1, 1, 4, 32>}]} {
    %cst = arith.constant 0.000000e+00 : f32
    %0 = vector.broadcast %cst : f32 to vector<4x32xf32>
    %c0 = arith.constant 0 : index
    %c0_0 = arith.constant 0 : index
    %c0_1 = arith.constant 0 : index
    %c0_2 = arith.constant 0 : index
    %c0_3 = arith.constant 0 : index
    %1 = vector.load %arg2[%c0, %c0_0, %c0_1, %c0_2, %c0_3] : memref<1x4x1x16x4xf32, #tpu.memory_space<vmem>>, vector<1x1x1x4x4xf32>
    %2 = vector.shape_cast %1 : vector<1x1x1x4x4xf32> to vector<4x4xf32>
    %c0_4 = arith.constant 0 : index
    %c0_5 = arith.constant 0 : index
    %c0_6 = arith.constant 0 : index
    %c0_7 = arith.constant 0 : index
    %3 = vector.load %arg3[%c0_4, %c0_5, %c0_6, %c0_7] : memref<4x4x4x32xbf16, #tpu.memory_space<vmem>>, vector<1x1x4x32xbf16>
    %4 = vector.shape_cast %3 : vector<1x1x4x32xbf16> to vector<4x32xbf16>
    %5 = arith.truncf %2 : vector<4x4xf32> to vector<4x4xbf16>
    %cst_8 = arith.constant dense<0.000000e+00> : vector<4x32xf32>
    %6 = tpu.matmul %5, %4, %cst_8 {dimension_numbers = #tpu.dot_dimension_numbers<[1], [0], [0], [1], [0, 0, 1, 1], [], []>} : vector<4x4xbf16>, vector<4x32xbf16>, vector<4x32xf32> -> vector<4x32xf32>
    %7 = arith.addf %0, %6 : vector<4x32xf32>
    %c0_9 = arith.constant 0 : index
    %c0_10 = arith.constant 0 : index
    %c0_11 = arith.constant 0 : index
    %c4 = arith.constant 4 : index
    %c0_12 = arith.constant 0 : index
    %8 = vector.load %arg2[%c0_9, %c0_10, %c0_11, %c4, %c0_12] : memref<1x4x1x16x4xf32, #tpu.memory_space<vmem>>, vector<1x1x1x4x4xf32>
    %9 = vector.shape_cast %8 : vector<1x1x1x4x4xf32> to vector<4x4xf32>
    %c0_13 = arith.constant 0 : index
    %c1 = arith.constant 1 : index
    %c0_14 = arith.constant 0 : index
    %c0_15 = arith.constant 0 : index
    %10 = vector.load %arg3[%c0_13, %c1, %c0_14, %c0_15] : memref<4x4x4x32xbf16, #tpu.memory_space<vmem>>, vector<1x1x4x32xbf16>
    %11 = vector.shape_cast %10 : vector<1x1x4x32xbf16> to vector<4x32xbf16>
    %12 = arith.truncf %9 : vector<4x4xf32> to vector<4x4xbf16>
    %cst_16 = arith.constant dense<0.000000e+00> : vector<4x32xf32>
    %13 = tpu.matmul %12, %11, %cst_16 {dimension_numbers = #tpu.dot_dimension_numbers<[1], [0], [0], [1], [0, 0, 1, 1], [], []>} : vector<4x4xbf16>, vector<4x32xbf16>, vector<4x32xf32> -> vector<4x32xf32>
    %14 = arith.addf %7, %13 : vector<4x32xf32>
    %c0_17 = arith.constant 0 : index
    %c0_18 = arith.constant 0 : index
    %c0_19 = arith.constant 0 : index
    %c8 = arith.constant 8 : index
    %c0_20 = arith.constant 0 : index
    %15 = vector.load %arg2[%c0_17, %c0_18, %c0_19, %c8, %c0_20] : memref<1x4x1x16x4xf32, #tpu.memory_space<vmem>>, vector<1x1x1x4x4xf32>
    %16 = vector.shape_cast %15 : vector<1x1x1x4x4xf32> to vector<4x4xf32>
    %c0_21 = arith.constant 0 : index
    %c2 = arith.constant 2 : index
    %c0_22 = arith.constant 0 : index
    %c0_23 = arith.constant 0 : index
    %17 = vector.load %arg3[%c0_21, %c2, %c0_22, %c0_23] : memref<4x4x4x32xbf16, #tpu.memory_space<vmem>>, vector<1x1x4x32xbf16>
    %18 = vector.shape_cast %17 : vector<1x1x4x32xbf16> to vector<4x32xbf16>
    %19 = arith.truncf %16 : vector<4x4xf32> to vector<4x4xbf16>
    %cst_24 = arith.constant dense<0.000000e+00> : vector<4x32xf32>
    %20 = tpu.matmul %19, %18, %cst_24 {dimension_numbers = #tpu.dot_dimension_numbers<[1], [0], [0], [1], [0, 0, 1, 1], [], []>} : vector<4x4xbf16>, vector<4x32xbf16>, vector<4x32xf32> -> vector<4x32xf32>
    %21 = arith.addf %14, %20 : vector<4x32xf32>
    %c0_25 = arith.constant 0 : index
    %c0_26 = arith.constant 0 : index
    %c0_27 = arith.constant 0 : index
    %c12 = arith.constant 12 : index
    %c0_28 = arith.constant 0 : index
    %22 = vector.load %arg2[%c0_25, %c0_26, %c0_27, %c12, %c0_28] : memref<1x4x1x16x4xf32, #tpu.memory_space<vmem>>, vector<1x1x1x4x4xf32>
    %23 = vector.shape_cast %22 : vector<1x1x1x4x4xf32> to vector<4x4xf32>
    %c0_29 = arith.constant 0 : index
    %c3 = arith.constant 3 : index
    %c0_30 = arith.constant 0 : index
    %c0_31 = arith.constant 0 : index
    %24 = vector.load %arg3[%c0_29, %c3, %c0_30, %c0_31] : memref<4x4x4x32xbf16, #tpu.memory_space<vmem>>, vector<1x1x4x32xbf16>
    %25 = vector.shape_cast %24 : vector<1x1x4x32xbf16> to vector<4x32xbf16>
    %26 = arith.truncf %23 : vector<4x4xf32> to vector<4x4xbf16>
    %cst_32 = arith.constant dense<0.000000e+00> : vector<4x32xf32>
    %27 = tpu.matmul %26, %25, %cst_32 {dimension_numbers = #tpu.dot_dimension_numbers<[1], [0], [0], [1], [0, 0, 1, 1], [], []>} : vector<4x4xbf16>, vector<4x32xbf16>, vector<4x32xf32> -> vector<4x32xf32>
    %28 = arith.addf %21, %27 : vector<4x32xf32>
    %c0_33 = arith.constant 0 : index
    %c1_34 = arith.constant 1 : index
    %c0_35 = arith.constant 0 : index
    %c0_36 = arith.constant 0 : index
    %c0_37 = arith.constant 0 : index
    %29 = vector.load %arg2[%c0_33, %c1_34, %c0_35, %c0_36, %c0_37] : memref<1x4x1x16x4xf32, #tpu.memory_space<vmem>>, vector<1x1x1x4x4xf32>
    %30 = vector.shape_cast %29 : vector<1x1x1x4x4xf32> to vector<4x4xf32>
    %c1_38 = arith.constant 1 : index
    %c0_39 = arith.constant 0 : index
    %c0_40 = arith.constant 0 : index
    %c0_41 = arith.constant 0 : index
    %31 = vector.load %arg3[%c1_38, %c0_39, %c0_40, %c0_41] : memref<4x4x4x32xbf16, #tpu.memory_space<vmem>>, vector<1x1x4x32xbf16>
    %32 = vector.shape_cast %31 : vector<1x1x4x32xbf16> to vector<4x32xbf16>
    %33 = arith.truncf %30 : vector<4x4xf32> to vector<4x4xbf16>
    %cst_42 = arith.constant dense<0.000000e+00> : vector<4x32xf32>
    %34 = tpu.matmul %33, %32, %cst_42 {dimension_numbers = #tpu.dot_dimension_numbers<[1], [0], [0], [1], [0, 0, 1, 1], [], []>} : vector<4x4xbf16>, vector<4x32xbf16>, vector<4x32xf32> -> vector<4x32xf32>
    %35 = arith.addf %28, %34 : vector<4x32xf32>
    %c0_43 = arith.constant 0 : index
    %c1_44 = arith.constant 1 : index
    %c0_45 = arith.constant 0 : index
    %c4_46 = arith.constant 4 : index
    %c0_47 = arith.constant 0 : index
    %36 = vector.load %arg2[%c0_43, %c1_44, %c0_45, %c4_46, %c0_47] : memref<1x4x1x16x4xf32, #tpu.memory_space<vmem>>, vector<1x1x1x4x4xf32>
    %37 = vector.shape_cast %36 : vector<1x1x1x4x4xf32> to vector<4x4xf32>
    %c1_48 = arith.constant 1 : index
    %c1_49 = arith.constant 1 : index
    %c0_50 = arith.constant 0 : index
    %c0_51 = arith.constant 0 : index
    %38 = vector.load %arg3[%c1_48, %c1_49, %c0_50, %c0_51] : memref<4x4x4x32xbf16, #tpu.memory_space<vmem>>, vector<1x1x4x32xbf16>
    %39 = vector.shape_cast %38 : vector<1x1x4x32xbf16> to vector<4x32xbf16>
    %40 = arith.truncf %37 : vector<4x4xf32> to vector<4x4xbf16>
    %cst_52 = arith.constant dense<0.000000e+00> : vector<4x32xf32>
    %41 = tpu.matmul %40, %39, %cst_52 {dimension_numbers = #tpu.dot_dimension_numbers<[1], [0], [0], [1], [0, 0, 1, 1], [], []>} : vector<4x4xbf16>, vector<4x32xbf16>, vector<4x32xf32> -> vector<4x32xf32>
    %42 = arith.addf %35, %41 : vector<4x32xf32>
    %c0_53 = arith.constant 0 : index
    %c1_54 = arith.constant 1 : index
    %c0_55 = arith.constant 0 : index
    %c8_56 = arith.constant 8 : index
    %c0_57 = arith.constant 0 : index
    %43 = vector.load %arg2[%c0_53, %c1_54, %c0_55, %c8_56, %c0_57] : memref<1x4x1x16x4xf32, #tpu.memory_space<vmem>>, vector<1x1x1x4x4xf32>
    %44 = vector.shape_cast %43 : vector<1x1x1x4x4xf32> to vector<4x4xf32>
    %c1_58 = arith.constant 1 : index
    %c2_59 = arith.constant 2 : index
    %c0_60 = arith.constant 0 : index
    %c0_61 = arith.constant 0 : index
    %45 = vector.load %arg3[%c1_58, %c2_59, %c0_60, %c0_61] : memref<4x4x4x32xbf16, #tpu.memory_space<vmem>>, vector<1x1x4x32xbf16>
    %46 = vector.shape_cast %45 : vector<1x1x4x32xbf16> to vector<4x32xbf16>
    %47 = arith.truncf %44 : vector<4x4xf32> to vector<4x4xbf16>
    %cst_62 = arith.constant dense<0.000000e+00> : vector<4x32xf32>
    %48 = tpu.matmul %47, %46, %cst_62 {dimension_numbers = #tpu.dot_dimension_numbers<[1], [0], [0], [1], [0, 0, 1, 1], [], []>} : vector<4x4xbf16>, vector<4x32xbf16>, vector<4x32xf32> -> vector<4x32xf32>
    %49 = arith.addf %42, %48 : vector<4x32xf32>
    %c0_63 = arith.constant 0 : index
    %c1_64 = arith.constant 1 : index
    %c0_65 = arith.constant 0 : index
    %c12_66 = arith.constant 12 : index
    %c0_67 = arith.constant 0 : index
    %50 = vector.load %arg2[%c0_63, %c1_64, %c0_65, %c12_66, %c0_67] : memref<1x4x1x16x4xf32, #tpu.memory_space<vmem>>, vector<1x1x1x4x4xf32>
    %51 = vector.shape_cast %50 : vector<1x1x1x4x4xf32> to vector<4x4xf32>
    %c1_68 = arith.constant 1 : index
    %c3_69 = arith.constant 3 : index
    %c0_70 = arith.constant 0 : index
    %c0_71 = arith.constant 0 : index
    %52 = vector.load %arg3[%c1_68, %c3_69, %c0_70, %c0_71] : memref<4x4x4x32xbf16, #tpu.memory_space<vmem>>, vector<1x1x4x32xbf16>
    %53 = vector.shape_cast %52 : vector<1x1x4x32xbf16> to vector<4x32xbf16>
    %54 = arith.truncf %51 : vector<4x4xf32> to vector<4x4xbf16>
    %cst_72 = arith.constant dense<0.000000e+00> : vector<4x32xf32>
    %55 = tpu.matmul %54, %53, %cst_72 {dimension_numbers = #tpu.dot_dimension_numbers<[1], [0], [0], [1], [0, 0, 1, 1], [], []>} : vector<4x4xbf16>, vector<4x32xbf16>, vector<4x32xf32> -> vector<4x32xf32>
    %56 = arith.addf %49, %55 : vector<4x32xf32>
    %c0_73 = arith.constant 0 : index
    %c2_74 = arith.constant 2 : index
    %c0_75 = arith.constant 0 : index
    %c0_76 = arith.constant 0 : index
    %c0_77 = arith.constant 0 : index
    %57 = vector.load %arg2[%c0_73, %c2_74, %c0_75, %c0_76, %c0_77] : memref<1x4x1x16x4xf32, #tpu.memory_space<vmem>>, vector<1x1x1x4x4xf32>
    %58 = vector.shape_cast %57 : vector<1x1x1x4x4xf32> to vector<4x4xf32>
    %c2_78 = arith.constant 2 : index
    %c0_79 = arith.constant 0 : index
    %c0_80 = arith.constant 0 : index
    %c0_81 = arith.constant 0 : index
    %59 = vector.load %arg3[%c2_78, %c0_79, %c0_80, %c0_81] : memref<4x4x4x32xbf16, #tpu.memory_space<vmem>>, vector<1x1x4x32xbf16>
    %60 = vector.shape_cast %59 : vector<1x1x4x32xbf16> to vector<4x32xbf16>
    %61 = arith.truncf %58 : vector<4x4xf32> to vector<4x4xbf16>
    %cst_82 = arith.constant dense<0.000000e+00> : vector<4x32xf32>
    %62 = tpu.matmul %61, %60, %cst_82 {dimension_numbers = #tpu.dot_dimension_numbers<[1], [0], [0], [1], [0, 0, 1, 1], [], []>} : vector<4x4xbf16>, vector<4x32xbf16>, vector<4x32xf32> -> vector<4x32xf32>
    %63 = arith.addf %56, %62 : vector<4x32xf32>
    %c0_83 = arith.constant 0 : index
    %c2_84 = arith.constant 2 : index
    %c0_85 = arith.constant 0 : index
    %c4_86 = arith.constant 4 : index
    %c0_87 = arith.constant 0 : index
    %64 = vector.load %arg2[%c0_83, %c2_84, %c0_85, %c4_86, %c0_87] : memref<1x4x1x16x4xf32, #tpu.memory_space<vmem>>, vector<1x1x1x4x4xf32>
    %65 = vector.shape_cast %64 : vector<1x1x1x4x4xf32> to vector<4x4xf32>
    %c2_88 = arith.constant 2 : index
    %c1_89 = arith.constant 1 : index
    %c0_90 = arith.constant 0 : index
    %c0_91 = arith.constant 0 : index
    %66 = vector.load %arg3[%c2_88, %c1_89, %c0_90, %c0_91] : memref<4x4x4x32xbf16, #tpu.memory_space<vmem>>, vector<1x1x4x32xbf16>
    %67 = vector.shape_cast %66 : vector<1x1x4x32xbf16> to vector<4x32xbf16>
    %68 = arith.truncf %65 : vector<4x4xf32> to vector<4x4xbf16>
    %cst_92 = arith.constant dense<0.000000e+00> : vector<4x32xf32>
    %69 = tpu.matmul %68, %67, %cst_92 {dimension_numbers = #tpu.dot_dimension_numbers<[1], [0], [0], [1], [0, 0, 1, 1], [], []>} : vector<4x4xbf16>, vector<4x32xbf16>, vector<4x32xf32> -> vector<4x32xf32>
    %70 = arith.addf %63, %69 : vector<4x32xf32>
    %c0_93 = arith.constant 0 : index
    %c2_94 = arith.constant 2 : index
    %c0_95 = arith.constant 0 : index
    %c8_96 = arith.constant 8 : index
    %c0_97 = arith.constant 0 : index
    %71 = vector.load %arg2[%c0_93, %c2_94, %c0_95, %c8_96, %c0_97] : memref<1x4x1x16x4xf32, #tpu.memory_space<vmem>>, vector<1x1x1x4x4xf32>
    %72 = vector.shape_cast %71 : vector<1x1x1x4x4xf32> to vector<4x4xf32>
    %c2_98 = arith.constant 2 : index
    %c2_99 = arith.constant 2 : index
    %c0_100 = arith.constant 0 : index
    %c0_101 = arith.constant 0 : index
    %73 = vector.load %arg3[%c2_98, %c2_99, %c0_100, %c0_101] : memref<4x4x4x32xbf16, #tpu.memory_space<vmem>>, vector<1x1x4x32xbf16>
    %74 = vector.shape_cast %73 : vector<1x1x4x32xbf16> to vector<4x32xbf16>
    %75 = arith.truncf %72 : vector<4x4xf32> to vector<4x4xbf16>
    %cst_102 = arith.constant dense<0.000000e+00> : vector<4x32xf32>
    %76 = tpu.matmul %75, %74, %cst_102 {dimension_numbers = #tpu.dot_dimension_numbers<[1], [0], [0], [1], [0, 0, 1, 1], [], []>} : vector<4x4xbf16>, vector<4x32xbf16>, vector<4x32xf32> -> vector<4x32xf32>
    %77 = arith.addf %70, %76 : vector<4x32xf32>
    %c0_103 = arith.constant 0 : index
    %c2_104 = arith.constant 2 : index
    %c0_105 = arith.constant 0 : index
    %c12_106 = arith.constant 12 : index
    %c0_107 = arith.constant 0 : index
    %78 = vector.load %arg2[%c0_103, %c2_104, %c0_105, %c12_106, %c0_107] : memref<1x4x1x16x4xf32, #tpu.memory_space<vmem>>, vector<1x1x1x4x4xf32>
    %79 = vector.shape_cast %78 : vector<1x1x1x4x4xf32> to vector<4x4xf32>
    %c2_108 = arith.constant 2 : index
    %c3_109 = arith.constant 3 : index
    %c0_110 = arith.constant 0 : index
    %c0_111 = arith.constant 0 : index
    %80 = vector.load %arg3[%c2_108, %c3_109, %c0_110, %c0_111] : memref<4x4x4x32xbf16, #tpu.memory_space<vmem>>, vector<1x1x4x32xbf16>
    %81 = vector.shape_cast %80 : vector<1x1x4x32xbf16> to vector<4x32xbf16>
    %82 = arith.truncf %79 : vector<4x4xf32> to vector<4x4xbf16>
    %cst_112 = arith.constant dense<0.000000e+00> : vector<4x32xf32>
    %83 = tpu.matmul %82, %81, %cst_112 {dimension_numbers = #tpu.dot_dimension_numbers<[1], [0], [0], [1], [0, 0, 1, 1], [], []>} : vector<4x4xbf16>, vector<4x32xbf16>, vector<4x32xf32> -> vector<4x32xf32>
    %84 = arith.addf %77, %83 : vector<4x32xf32>
    %c0_113 = arith.constant 0 : index
    %c3_114 = arith.constant 3 : index
    %c0_115 = arith.constant 0 : index
    %c0_116 = arith.constant 0 : index
    %c0_117 = arith.constant 0 : index
    %85 = vector.load %arg2[%c0_113, %c3_114, %c0_115, %c0_116, %c0_117] : memref<1x4x1x16x4xf32, #tpu.memory_space<vmem>>, vector<1x1x1x4x4xf32>
    %86 = vector.shape_cast %85 : vector<1x1x1x4x4xf32> to vector<4x4xf32>
    %c3_118 = arith.constant 3 : index
    %c0_119 = arith.constant 0 : index
    %c0_120 = arith.constant 0 : index
    %c0_121 = arith.constant 0 : index
    %87 = vector.load %arg3[%c3_118, %c0_119, %c0_120, %c0_121] : memref<4x4x4x32xbf16, #tpu.memory_space<vmem>>, vector<1x1x4x32xbf16>
    %88 = vector.shape_cast %87 : vector<1x1x4x32xbf16> to vector<4x32xbf16>
    %89 = arith.truncf %86 : vector<4x4xf32> to vector<4x4xbf16>
    %cst_122 = arith.constant dense<0.000000e+00> : vector<4x32xf32>
    %90 = tpu.matmul %89, %88, %cst_122 {dimension_numbers = #tpu.dot_dimension_numbers<[1], [0], [0], [1], [0, 0, 1, 1], [], []>} : vector<4x4xbf16>, vector<4x32xbf16>, vector<4x32xf32> -> vector<4x32xf32>
    %91 = arith.addf %84, %90 : vector<4x32xf32>
    %c0_123 = arith.constant 0 : index
    %c3_124 = arith.constant 3 : index
    %c0_125 = arith.constant 0 : index
    %c4_126 = arith.constant 4 : index
    %c0_127 = arith.constant 0 : index
    %92 = vector.load %arg2[%c0_123, %c3_124, %c0_125, %c4_126, %c0_127] : memref<1x4x1x16x4xf32, #tpu.memory_space<vmem>>, vector<1x1x1x4x4xf32>
    %93 = vector.shape_cast %92 : vector<1x1x1x4x4xf32> to vector<4x4xf32>
    %c3_128 = arith.constant 3 : index
    %c1_129 = arith.constant 1 : index
    %c0_130 = arith.constant 0 : index
    %c0_131 = arith.constant 0 : index
    %94 = vector.load %arg3[%c3_128, %c1_129, %c0_130, %c0_131] : memref<4x4x4x32xbf16, #tpu.memory_space<vmem>>, vector<1x1x4x32xbf16>
    %95 = vector.shape_cast %94 : vector<1x1x4x32xbf16> to vector<4x32xbf16>
    %96 = arith.truncf %93 : vector<4x4xf32> to vector<4x4xbf16>
    %cst_132 = arith.constant dense<0.000000e+00> : vector<4x32xf32>
    %97 = tpu.matmul %96, %95, %cst_132 {dimension_numbers = #tpu.dot_dimension_numbers<[1], [0], [0], [1], [0, 0, 1, 1], [], []>} : vector<4x4xbf16>, vector<4x32xbf16>, vector<4x32xf32> -> vector<4x32xf32>
    %98 = arith.addf %91, %97 : vector<4x32xf32>
    %c0_133 = arith.constant 0 : index
    %c3_134 = arith.constant 3 : index
    %c0_135 = arith.constant 0 : index
    %c8_136 = arith.constant 8 : index
    %c0_137 = arith.constant 0 : index
    %99 = vector.load %arg2[%c0_133, %c3_134, %c0_135, %c8_136, %c0_137] : memref<1x4x1x16x4xf32, #tpu.memory_space<vmem>>, vector<1x1x1x4x4xf32>
    %100 = vector.shape_cast %99 : vector<1x1x1x4x4xf32> to vector<4x4xf32>
    %c3_138 = arith.constant 3 : index
    %c2_139 = arith.constant 2 : index
    %c0_140 = arith.constant 0 : index
    %c0_141 = arith.constant 0 : index
    %101 = vector.load %arg3[%c3_138, %c2_139, %c0_140, %c0_141] : memref<4x4x4x32xbf16, #tpu.memory_space<vmem>>, vector<1x1x4x32xbf16>
    %102 = vector.shape_cast %101 : vector<1x1x4x32xbf16> to vector<4x32xbf16>
    %103 = arith.truncf %100 : vector<4x4xf32> to vector<4x4xbf16>
    %cst_142 = arith.constant dense<0.000000e+00> : vector<4x32xf32>
    %104 = tpu.matmul %103, %102, %cst_142 {dimension_numbers = #tpu.dot_dimension_numbers<[1], [0], [0], [1], [0, 0, 1, 1], [], []>} : vector<4x4xbf16>, vector<4x32xbf16>, vector<4x32xf32> -> vector<4x32xf32>
    %105 = arith.addf %98, %104 : vector<4x32xf32>
    %c0_143 = arith.constant 0 : index
    %c3_144 = arith.constant 3 : index
    %c0_145 = arith.constant 0 : index
    %c12_146 = arith.constant 12 : index
    %c0_147 = arith.constant 0 : index
    %106 = vector.load %arg2[%c0_143, %c3_144, %c0_145, %c12_146, %c0_147] : memref<1x4x1x16x4xf32, #tpu.memory_space<vmem>>, vector<1x1x1x4x4xf32>
    %107 = vector.shape_cast %106 : vector<1x1x1x4x4xf32> to vector<4x4xf32>
    %c3_148 = arith.constant 3 : index
    %c3_149 = arith.constant 3 : index
    %c0_150 = arith.constant 0 : index
    %c0_151 = arith.constant 0 : index
    %108 = vector.load %arg3[%c3_148, %c3_149, %c0_150, %c0_151] : memref<4x4x4x32xbf16, #tpu.memory_space<vmem>>, vector<1x1x4x32xbf16>
    %109 = vector.shape_cast %108 : vector<1x1x4x32xbf16> to vector<4x32xbf16>
    %110 = arith.truncf %107 : vector<4x4xf32> to vector<4x4xbf16>
    %cst_152 = arith.constant dense<0.000000e+00> : vector<4x32xf32>
    %111 = tpu.matmul %110, %109, %cst_152 {dimension_numbers = #tpu.dot_dimension_numbers<[1], [0], [0], [1], [0, 0, 1, 1], [], []>} : vector<4x4xbf16>, vector<4x32xbf16>, vector<4x32xf32> -> vector<4x32xf32>
    %112 = arith.addf %105, %111 : vector<4x32xf32>
    %c0_153 = arith.constant 0 : index
    %c0_154 = arith.constant 0 : index
    %113 = vector.load %arg4[%c0_153, %c0_154] : memref<1x32xf32, #tpu.memory_space<vmem>>, vector<1x32xf32>
    %114 = vector.broadcast %113 : vector<1x32xf32> to vector<4x32xf32>
    %115 = arith.addf %112, %114 : vector<4x32xf32>
    %c0_155 = arith.constant 0 : index
    %c0_156 = arith.constant 0 : index
    %c0_157 = arith.constant 0 : index
    %c0_158 = arith.constant 0 : index
    %116 = vector.load %arg5[%c0_155, %c0_156, %c0_157, %c0_158] : memref<1x1x4x32xf32, #tpu.memory_space<vmem>>, vector<1x1x4x32xf32>
    %117 = vector.shape_cast %116 : vector<1x1x4x32xf32> to vector<4x32xf32>
    %118 = vector.shape_cast %115 : vector<4x32xf32> to vector<1x1x4x32xf32>
    tpu.vector_store %arg5[%c0_155, %c0_156, %c0_157, %c0_158], %118 {strides = array<i32>} : memref<1x1x4x32xf32, #tpu.memory_space<vmem>>, vector<1x1x4x32xf32>,
    return
  }
  func.func @transform_0(%arg0: i32, %arg1: i32) -> (i32, i32, i32, i32, i32) {
    %c0_i32 = arith.constant 0 : i32
    %c0_i32_0 = arith.constant 0 : i32
    %c0_i32_1 = arith.constant 0 : i32
    %c0_i32_2 = arith.constant 0 : i32
    return %arg0, %c0_i32, %arg1, %c0_i32_0, %c0_i32_1 : i32, i32, i32, i32, i32
  }
  func.func @transform_1(%arg0: i32, %arg1: i32) -> (i32, i32, i32, i32) {
    %c0_i32 = arith.constant 0 : i32
    %c0_i32_0 = arith.constant 0 : i32
    %c0_i32_1 = arith.constant 0 : i32
    %c0_i32_2 = arith.constant 0 : i32
    %c0_i32_3 = arith.constant 0 : i32
    return %c0_i32, %c0_i32_0, %c0_i32_1, %c0_i32_2 : i32, i32, i32, i32
  }
  func.func @transform_2(%arg0: i32, %arg1: i32) -> (i32, i32) {
    %c0_i32 = arith.constant 0 : i32
    %c0_i32_0 = arith.constant 0 : i32
    %c0_i32_1 = arith.constant 0 : i32
    return %c0_i32, %c0_i32_0 : i32, i32
  }
  func.func @transform_3(%arg0: i32, %arg1: i32) -> (i32, i32, i32, i32) {
    %c0_i32 = arith.constant 0 : i32
    %c0_i32_0 = arith.constant 0 : i32
    %c0_i32_1 = arith.constant 0 : i32
    return %arg0, %arg1, %c0_i32, %c0_i32_0 : i32, i32, i32, i32
  }
}

</mosaic_0001>

<llo_original>
// kernel: tpu_custom_call.1
$region0: #{tpu_custom_call.1}
  #allocation0 [shape = 'u32[]', space=smem, size = 0x4, offset = 0x4, fixed_abs, tag = 'smem constant byte address 0x4 - core index']
  #allocation1 [shape = 'u32[72,128]{1,0:T(1,128)}', space=vmem, size = 0x9000, scoped, tag = 'internal scratch']
  %s0 = inlined_call_operand.vmem [shape: f32[4,4,4,16,4], index: 0, kind: input, shape index: {}]
  %s1 = inlined_call_operand.vmem [shape: bf16[4,4,4,32], index: 1, kind: input, shape index: {}]
  %s2 = inlined_call_operand.vmem [shape: f32[1,32], index: 2, kind: input, shape index: {}]
  %s3 = inlined_call_operand.hbm [shape: f32[4,4,4,32], index: 3, kind: output, shape index: {}]
  %s4 = sld [smem:[#allocation0]]
  $region83: #{tpu_custom_call.1} parent=0
    _
  %s6 = ssub.s32 1, %s4
  %s7 = scalar_select 0, %s6, %s4
  $region1: #{tpu_custom_call.1} parent=0
    #allocation2 [shape = 'u8[65536]{0}', space=vmem, size = 0x10000, scoped, tag = 'input window, operand 0']
    #allocation3 [shape = 'u8[4096]{0}', space=vmem, size = 0x1000, scoped, tag = 'output window, operand 0']
    #allocation4 [shape = 's32[2]{0}', space=sflag, size = 0x8, scoped, tag = 'scoped memory for tpu_custom_call.1']
    %8 = vsyncpa [#allocation4], 0
    %s9 = scalar_lea.sflag [#allocation4], 1
    %10 = vsyncpa %s9, 0
    loop: start=0, step=1, limit=18
    $region2: #{tpu_custom_call.1} parent=1 // loop_pre_header
      _
    $region3: #{tpu_custom_call.1} parent=1 // loop_header
      %s12 = sphi 0, %s16
      %p13 = scmp.ge.s32.totalorder %s12, 18
      %s19 = sphi 0, %s31
      %s20 = sphi 0, %s27
      %s21 = sphi 0, %s19
      %s22 = sphi 0, %s20
      %s23 = sphi 0, %s21
      %s24 = sphi 0, %s22
      %s36 = sphi 0, %s38
      %s39 = sphi 0, %s36
      %s40 = sphi 0, %s39
      %s56 = sphi 0, %s40
      %s60 = sphi 0, %s60
      %s62 = sphi 0, %s60
      %s63 = sphi 0, %s62
      %s77 = sphi 0, %s63
      %s81 = sphi 0, %s81
      %s83 = sphi 0, %s81
      %s84 = sphi 0, %s83
      %s98 = sphi 0, %s84
      %s106 = sphi 0, %s108
      %s109 = sphi 0, %s106
      %s110 = sphi 0, %s109
      %s126 = sphi 0, %s110
    $region4: #{tpu_custom_call.1} parent=1 // loop_header_branch
      %15 = sbr.rel (%p13) target = $region8
    $region5: #{tpu_custom_call.1} parent=1 // loop_body
      %s17 = ssub.s32 %s12, 1
      %s18 = ssub.s32 %s12, 2
      %s25 = sadd.s32 1, %s20
      %p26 = scmp.ge.s32.totalorder %s25, 4
      %s27 = scalar_select %p26, 0, %s25
      %s28 = sadd.s32 1, %s19
      %s29 = scalar_select %p26, %s28, %s19
      %p30 = scmp.ge.s32.totalorder %s29, 4
      %s31 = scalar_select %p30, 0, %s29
      %s32 = ssub.s32 %s19, %s31
      %s33 = ssub.s32 %s20, %s27
      %s34 = sor.u32 %s32, %s33
      %p35 = scmp.eq.s32.totalorder %s34, 0
      %s37 = sadd.s32 %s36, 1
      %s38 = scalar_select %p35, %s36, %s37
      %p41 = pneg %p35
      %p42 = scmp.eq.s32.totalorder %s12, 15
      %p43 = por %p41, %p42
      %p44 = scmp.ne.s32.totalorder %s36, %s39
      %p45 = scmp.eq.s32.totalorder %s12, 0
      %p46 = por %p44, %p45
      %p47 = scmp.ne.s32.totalorder %s36, %s39
      %p48 = scmp.eq.s32.totalorder %s17, 15
      %p49 = por %p47, %p48
      %p50 = scmp.ne.s32.totalorder %s39, %s40
      %p51 = scmp.eq.s32.totalorder %s17, 0
      %p52 = por %p50, %p51
      %p53 = scmp.ne.s32.totalorder %s39, %s40
      %p54 = scmp.eq.s32.totalorder %s18, 15
      %p55 = por %p53, %p54
      %p57 = scmp.ne.s32.totalorder %s40, %s56
      %p58 = scmp.eq.s32.totalorder %s18, 0
      %p59 = por %p57, %p58
      %s61 = sadd.s32 %s60, 1
      %p64 = scmp.eq.s32.totalorder %s12, 15
      %p65 = scmp.ne.s32.totalorder %s60, %s62
      %p66 = scmp.eq.s32.totalorder %s12, 0
      %p67 = por %p65, %p66
      %p68 = scmp.ne.s32.totalorder %s60, %s62
      %p69 = scmp.eq.s32.totalorder %s17, 15
      %p70 = por %p68, %p69
      %p71 = scmp.ne.s32.totalorder %s62, %s63
      %p72 = scmp.eq.s32.totalorder %s17, 0
      %p73 = por %p71, %p72
      %p74 = scmp.ne.s32.totalorder %s62, %s63
      %p75 = scmp.eq.s32.totalorder %s18, 15
      %p76 = por %p74, %p75
      %p78 = scmp.ne.s32.totalorder %s63, %s77
      %p79 = scmp.eq.s32.totalorder %s18, 0
      %p80 = por %p78, %p79
      %s82 = sadd.s32 %s81, 1
      %p85 = scmp.eq.s32.totalorder %s12, 15
      %p86 = scmp.ne.s32.totalorder %s81, %s83
      %p87 = scmp.eq.s32.totalorder %s12, 0
      %p88 = por %p86, %p87
      %p89 = scmp.ne.s32.totalorder %s81, %s83
      %p90 = scmp.eq.s32.totalorder %s17, 15
      %p91 = por %p89, %p90
      %p92 = scmp.ne.s32.totalorder %s83, %s84
      %p93 = scmp.eq.s32.totalorder %s17, 0
      %p94 = por %p92, %p93
      %p95 = scmp.ne.s32.totalorder %s83, %s84
      %p96 = scmp.eq.s32.totalorder %s18, 15
      %p97 = por %p95, %p96
      %p99 = scmp.ne.s32.totalorder %s84, %s98
      %p100 = scmp.eq.s32.totalorder %s18, 0
      %p101 = por %p99, %p100
      %s102 = ssub.s32 %s19, %s31
      %s103 = ssub.s32 %s20, %s27
      %s104 = sor.u32 %s102, %s103
      %p105 = scmp.eq.s32.totalorder %s104, 0
      %s107 = sadd.s32 %s106, 1
      %s108 = scalar_select %p105, %s106, %s107
      %p111 = pneg %p105
      %p112 = scmp.eq.s32.totalorder %s12, 15
      %p113 = por %p111, %p112
      %p114 = scmp.ne.s32.totalorder %s106, %s109
      %p115 = scmp.eq.s32.totalorder %s12, 0
      %p116 = por %p114, %p115
      %p117 = scmp.ne.s32.totalorder %s106, %s109
      %p118 = scmp.eq.s32.totalorder %s17, 15
      %p119 = por %p117, %p118
      %p120 = scmp.ne.s32.totalorder %s109, %s110
      %p121 = scmp.eq.s32.totalorder %s17, 0
      %p122 = por %p120, %p121
      %p123 = scmp.ne.s32.totalorder %s109, %s110
      %p124 = scmp.eq.s32.totalorder %s18, 15
      %p125 = por %p123, %p124
      %p127 = scmp.ne.s32.totalorder %s110, %s126
      %p128 = scmp.eq.s32.totalorder %s18, 0
      %p129 = por %p127, %p128
      %p130 = scmp.le.s32.totalorder 1, %s12
      %p131 = scmp.lt.s32.totalorder %s12, 17
      %p132 = pnand %p130, %p131
      %p133 = pneg %p132
      // Predicated region
      $region9: #{tpu_custom_call.1} parent=5 // pred_check
        _
      $region10: #{tpu_custom_call.1} parent=5 // pred_check_branch
        %135 = sbr.rel (%p132) target = $region12
      $region11: #{tpu_custom_call.1} parent=5 // pred_region
        %s136 = ssub.s32 %s12, 1
        // Predicated region
        $region13: #{tpu_custom_call.1} parent=11 // pred_check
          %p137 = pneg %p73
        $region14: #{tpu_custom_call.1} parent=11 // pred_check_branch
          %139 = sbr.rel (%p137) target = $region16
        $region15: #{tpu_custom_call.1} parent=11 // pred_region
          _
        $region16: #{tpu_custom_call.1} parent=11 // pred_fallthru
          _
        // Predicated region
        $region17: #{tpu_custom_call.1} parent=11 // pred_check
          %p140 = pneg %p94
        $region18: #{tpu_custom_call.1} parent=11 // pred_check_branch
          %142 = sbr.rel (%p140) target = $region20
        $region19: #{tpu_custom_call.1} parent=11 // pred_region
          _
        $region20: #{tpu_custom_call.1} parent=11 // pred_fallthru
          _
      $region12: #{tpu_custom_call.1} parent=5 // pred_fallthru
        _
      %p143 = scmp.lt.s32.totalorder %s12, 16
      // Predicated region
      $region21: #{tpu_custom_call.1} parent=5 // pred_check
        %p144 = pneg %p143
      $region22: #{tpu_custom_call.1} parent=5 // pred_check_branch
        %146 = sbr.rel (%p144) target = $region24
      $region23: #{tpu_custom_call.1} parent=5 // pred_region
        // Predicated region
        $region25: #{tpu_custom_call.1} parent=23 // pred_check
          %p147 = pneg %p46
        $region26: #{tpu_custom_call.1} parent=23 // pred_check_branch
          %149 = sbr.rel (%p147) target = $region28
        $region27: #{tpu_custom_call.1} parent=23 // pred_region
          %s150 = sand.u32 %s36, 1
          %s151 = sand.u32 %s36, 1
          %s152 = smul.addr %s151, 64
          %s153 = scalar_lea.vmem [#allocation2], %s152
          %s154 = smul.addr %s20, 2
          %s155 = smul.addr %s19, 32
          %s156 = sadd.s32 %s154, %s155
          %s157 = smul.addr %s156, 8
          %s158 = scalar_lea.vmem %s0, %s157
          // Predicated region
          $region29: #{tpu_custom_call.1} parent=27 // pred_check
            _
          $region30: #{tpu_custom_call.1} parent=27 // pred_check_branch
            %160 = sbr.rel (0) target = $region32
          $region31: #{tpu_custom_call.1} parent=27 // pred_region
            // Predicated region
            $region33: #{tpu_custom_call.1} parent=31 // pred_check
              _
            $region34: #{tpu_custom_call.1} parent=31 // pred_check_branch
              %162 = sbr.rel (0) target = $region36
            $region35: #{tpu_custom_call.1} parent=31 // pred_region
              // Predicated region
              $region48: #{tpu_custom_call.1} parent=35 // pred_check
                _
              $region49: #{tpu_custom_call.1} parent=35 // pred_check_branch
                %192 = sbr.rel (0) target = $region51
              $region50: #{tpu_custom_call.1} parent=35 // pred_region
                loop: start=0, step=1, limit=1
                $region52: #{tpu_custom_call.1} parent=50 // loop_pre_header
                  _
                $region53: #{tpu_custom_call.1} parent=50 // loop_header
                  %s194 = sphi 0, %s198
                  %p195 = scmp.ge.s32.totalorder %s194, 1
                  %s199 = sphi %s158, %s158
                  %s200 = sphi %s153, %s153
                $region54: #{tpu_custom_call.1} parent=50 // loop_header_branch
                  %197 = sbr.rel (%p195) target = $region58
                $region55: #{tpu_custom_call.1} parent=50 // loop_body
                  %v201 = vld [vmem:[%s199] sm:$0xff]
                  %202 = vst [vmem:[%s200] sm:$0xff] %v201
                  %v203 = vld [vmem:[%s199 + $0x8] sm:$0xff]
                  %204 = vst [vmem:[%s200 + $0x8] sm:$0xff] %v203
                  %v205 = vld [vmem:[%s199 + $0x40] sm:$0xff]
                  %206 = vst [vmem:[%s200 + $0x10] sm:$0xff] %v205
                  %v207 = vld [vmem:[%s199 + $0x48] sm:$0xff]
                  %208 = vst [vmem:[%s200 + $0x18] sm:$0xff] %v207
                  %v209 = vld [vmem:[%s199 + $0x80] sm:$0xff]
                  %210 = vst [vmem:[%s200 + $0x20] sm:$0xff] %v209
                  %v211 = vld [vmem:[%s199 + $0x88] sm:$0xff]
                  %212 = vst [vmem:[%s200 + $0x28] sm:$0xff] %v211
                  %v213 = vld [vmem:[%s199 + $0xc0] sm:$0xff]
                  %214 = vst [vmem:[%s200 + $0x30] sm:$0xff] %v213
                  %v215 = vld [vmem:[%s199 + $0xc8] sm:$0xff]
                  %216 = vst [vmem:[%s200 + $0x38] sm:$0xff] %v215
                $region56: #{tpu_custom_call.1} parent=50 // loop_footer
                  %s198 = sadd.s32 1, %s194
                $region57: #{tpu_custom_call.1} parent=50 // loop_footer_branch
                  %193 = sbr.rel target = $region53
                $region58: #{tpu_custom_call.1} parent=50 // loop_exit
                  _
              $region51: #{tpu_custom_call.1} parent=35 // pred_fallthru
                _
              // Predicated region
              $region59: #{tpu_custom_call.1} parent=35 // pred_check
                _
              $region60: #{tpu_custom_call.1} parent=35 // pred_check_branch
                %218 = sbr.rel target = $region62
              $region61: #{tpu_custom_call.1} parent=35 // pred_region
                _
              $region62: #{tpu_custom_call.1} parent=35 // pred_fallthru
                _
            $region36: #{tpu_custom_call.1} parent=31 // pred_fallthru
              _
            // Predicated region
            $region37: #{tpu_custom_call.1} parent=31 // pred_check
              _
            $region38: #{tpu_custom_call.1} parent=31 // pred_check_branch
              %164 = sbr.rel target = $region40
            $region39: #{tpu_custom_call.1} parent=31 // pred_region
              %s166 = ssub.s32 256, 1
              loop: start=0, step=1, limit=1
              $region41: #{tpu_custom_call.1} parent=39 // loop_pre_header
                _
              $region42: #{tpu_custom_call.1} parent=39 // loop_header
                %s168 = sphi 0, %s172
                %p169 = scmp.ge.s32.totalorder %s168, 1
                %s173 = sphi %s158, %s158
                %s174 = sphi %s153, %s153
              $region43: #{tpu_custom_call.1} parent=39 // loop_header_branch
                %171 = sbr.rel (%p169) target = $region47
              $region44: #{tpu_custom_call.1} parent=39 // loop_body
                %v175 = vld [vmem:[%s173] sm:%s166]
                %176 = vst [vmem:[%s174] sm:%s166] %v175
                %v177 = vld [vmem:[%s173 + $0x8] sm:%s166]
                %178 = vst [vmem:[%s174 + $0x8] sm:%s166] %v177
                %v179 = vld [vmem:[%s173 + $0x40] sm:%s166]
                %180 = vst [vmem:[%s174 + $0x10] sm:%s166] %v179
                %v181 = vld [vmem:[%s173 + $0x48] sm:%s166]
                %182 = vst [vmem:[%s174 + $0x18] sm:%s166] %v181
                %v183 = vld [vmem:[%s173 + $0x80] sm:%s166]
                %184 = vst [vmem:[%s174 + $0x20] sm:%s166] %v183
                %v185 = vld [vmem:[%s173 + $0x88] sm:%s166]
                %186 = vst [vmem:[%s174 + $0x28] sm:%s166] %v185
                %v187 = vld [vmem:[%s173 + $0xc0] sm:%s166]
                %188 = vst [vmem:[%s174 + $0x30] sm:%s166] %v187
                %v189 = vld [vmem:[%s173 + $0xc8] sm:%s166]
                %190 = vst [vmem:[%s174 + $0x38] sm:%s166] %v189
              $region45: #{tpu_custom_call.1} parent=39 // loop_footer
                %s172 = sadd.s32 1, %s168
              $region46: #{tpu_custom_call.1} parent=39 // loop_footer_branch
                %167 = sbr.rel target = $region42
              $region47: #{tpu_custom_call.1} parent=39 // loop_exit
                _
            $region40: #{tpu_custom_call.1} parent=31 // pred_fallthru
              _
          $region32: #{tpu_custom_call.1} parent=27 // pred_fallthru
            _
          %219 = vnop
        $region28: #{tpu_custom_call.1} parent=23 // pred_fallthru
          _
      $region24: #{tpu_custom_call.1} parent=5 // pred_fallthru
        _
      %p220 = scmp.le.s32.totalorder 1, %s12
      %p221 = scmp.lt.s32.totalorder %s12, 17
      %p222 = pnand %p220, %p221
      %p223 = pneg %p222
      // Predicated region
      $region63: #{tpu_custom_call.1} parent=5 // pred_check
        _
      $region64: #{tpu_custom_call.1} parent=5 // pred_check_branch
        %225 = sbr.rel (%p222) target = $region66
      $region65: #{tpu_custom_call.1} parent=5 // pred_region
        %s226 = ssub.s32 %s12, 1
        %s227 = sand.u32 %s39, 1
        %s228 = sand.u32 %s39, 1
        %s229 = smul.addr %s228, 64
        %s230 = scalar_lea.vmem [#allocation2], %s229
        // Predicated region
        $region67: #{tpu_custom_call.1} parent=65 // pred_check
          %p231 = pneg %p52
        $region68: #{tpu_custom_call.1} parent=65 // pred_check_branch
          %233 = sbr.rel (%p231) target = $region70
        $region69: #{tpu_custom_call.1} parent=65 // pred_region
          _
        $region70: #{tpu_custom_call.1} parent=65 // pred_fallthru
          _
        %s234 = sand.u32 %s39, 1
        %s235 = sand.u32 %s39, 1
        %s236 = smul.addr %s235, 64
        %s237 = scalar_lea.vmem [#allocation2], %s236
        %p238 = pneg %p52
        %p239 = pneg %p49
        %p240 = pneg %p73
        %p241 = pneg %p70
        %p242 = pneg %p94
        %p243 = pneg %p91
        %p244 = pneg %p122
        %p245 = pneg %p119
        %s246 = sand.u32 %s109, 1
        %s247 = scalar_lea.sflag [#allocation4], %s246
        %s248 = sand.u32 %s109, 1
        %s249 = smul.addr %s248, 4
        %s250 = scalar_lea.vmem [#allocation3], %s249
        %v252 = vld [vmem:[%s230] sm:$0xf]
        %v253 = vld [vmem:[%s1] sm:$0x3]
        %v254 = vpack.c.bf16 %v252, %v252
        %v255 = vld [vmem:[%s230 + $0x4] sm:$0xf]
        %s256 = scalar_lea.vmem %s1, 2
        %v257 = vld [vmem:[%s256] sm:$0x3]
        %v258 = vpack.c.bf16 %v255, %v255
        %vm259 = vcmask 31744
        %v261 = vsel %vm259, %v258, 0
        %vm263 = vcmask 1041408
        %v265 = vsel %vm263, %v257, 0
        %267 = vmatpush.bf16.msra.mxu0 0
        %268 = vmatpush.bf16.msra.mxu0 0
        %269 = vmatpush.bf16.msra.mxu0 0
        %270 = vmatpush.bf16.msra.mxu0 0
        %271 = vmatpush.bf16.msra.mxu0 0
        %272 = vmatpush.bf16.msra.mxu0 0
        %273 = vmatpush.bf16.msra.mxu0 0
        %274 = vmatpush.bf16.msra.mxu0 %v265
        %275 = vmatmul.bf16.gmra.mxu0 %v261
        %v276 = vpop.f32.mrf.mxu0
        %v277 = vadd.f32 0.0, %v276
        %v278 = vpop.f32.mrf.mxu0
        %279 = vdwg.mxu0
        %v281 = vsel %vm259, %v254, 0
        %v284 = vsel %vm263, %v253, 0
        %286 = vmatpush.bf16.msra.mxu0 0
        %287 = vmatpush.bf16.msra.mxu0 0
        %288 = vmatpush.bf16.msra.mxu0 0
        %289 = vmatpush.bf16.msra.mxu0 0
        %290 = vmatpush.bf16.msra.mxu0 0
        %291 = vmatpush.bf16.msra.mxu0 0
        %292 = vmatpush.bf16.msra.mxu0 0
        %293 = vmatpush.bf16.msra.mxu0 %v284
        %294 = vmatmul.bf16.gmra.mxu0 %v281
        %v295 = vpop.f32.mrf.mxu0
        %v296 = vadd.f32 %v277, %v295
        %v297 = vpop.f32.mrf.mxu0
        %298 = vdwg.mxu0
        %v299 = vld [vmem:[%s230 + $0x8] sm:$0xf]
        %s300 = scalar_lea.vmem %s1, 4
        %v301 = vld [vmem:[%s300] sm:$0x3]
        %v302 = vpack.c.bf16 %v299, %v299
        %v304 = vsel %vm259, %v302, 0
        %v307 = vsel %vm263, %v301, 0
        %309 = vmatpush.bf16.msra.mxu0 0
        %310 = vmatpush.bf16.msra.mxu0 0
        %311 = vmatpush.bf16.msra.mxu0 0
        %312 = vmatpush.bf16.msra.mxu0 0
        %313 = vmatpush.bf16.msra.mxu0 0
        %314 = vmatpush.bf16.msra.mxu0 0
        %315 = vmatpush.bf16.msra.mxu0 0
        %316 = vmatpush.bf16.msra.mxu0 %v307
        %317 = vmatmul.bf16.gmra.mxu0 %v304
        %v318 = vpop.f32.mrf.mxu0
        %v319 = vadd.f32 0.0, %v318
        %v320 = vpop.f32.mrf.mxu0
        %321 = vdwg.mxu0
        %v322 = vadd.f32 %v296, %v319
        %v323 = vld [vmem:[%s230 + $0xc] sm:$0xf]
        %s324 = scalar_lea.vmem %s1, 6
        %v325 = vld [vmem:[%s324] sm:$0x3]
        %v326 = vpack.c.bf16 %v323, %v323
        %v328 = vsel %vm259, %v326, 0
        %v331 = vsel %vm263, %v325, 0
        %333 = vmatpush.bf16.msra.mxu0 0
        %334 = vmatpush.bf16.msra.mxu0 0
        %335 = vmatpush.bf16.msra.mxu0 0
        %336 = vmatpush.bf16.msra.mxu0 0
        %337 = vmatpush.bf16.msra.mxu0 0
        %338 = vmatpush.bf16.msra.mxu0 0
        %339 = vmatpush.bf16.msra.mxu0 0
        %340 = vmatpush.bf16.msra.mxu0 %v331
        %341 = vmatmul.bf16.gmra.mxu0 %v328
        %v342 = vpop.f32.mrf.mxu0
        %v343 = vadd.f32 0.0, %v342
        %v344 = vpop.f32.mrf.mxu0
        %345 = vdwg.mxu0
        %v346 = vadd.f32 %v322, %v343
        %s347 = scalar_lea.vmem %s230, 16 [#allocation2]
        %v348 = vld [vmem:[%s347] sm:$0xf]
        %s349 = scalar_lea.vmem %s1, 8
        %v350 = vld [vmem:[%s349] sm:$0x3]
        %v351 = vpack.c.bf16 %v348, %v348
        %v353 = vsel %vm259, %v351, 0
        %v356 = vsel %vm263, %v350, 0
        %358 = vmatpush.bf16.msra.mxu0 0
        %359 = vmatpush.bf16.msra.mxu0 0
        %360 = vmatpush.bf16.msra.mxu0 0
        %361 = vmatpush.bf16.msra.mxu0 0
        %362 = vmatpush.bf16.msra.mxu0 0
        %363 = vmatpush.bf16.msra.mxu0 0
        %364 = vmatpush.bf16.msra.mxu0 0
        %365 = vmatpush.bf16.msra.mxu0 %v356
        %366 = vmatmul.bf16.gmra.mxu0 %v353
        %v367 = vpop.f32.mrf.mxu0
        %v368 = vadd.f32 0.0, %v367
        %v369 = vpop.f32.mrf.mxu0
        %370 = vdwg.mxu0
        %v371 = vadd.f32 %v346, %v368
        %v372 = vld [vmem:[%s347 + $0x4] sm:$0xf]
        %s373 = scalar_lea.vmem %s1, 10
        %v374 = vld [vmem:[%s373] sm:$0x3]
        %v375 = vpack.c.bf16 %v372, %v372
        %v377 = vsel %vm259, %v375, 0
        %v380 = vsel %vm263, %v374, 0
        %382 = vmatpush.bf16.msra.mxu0 0
        %383 = vmatpush.bf16.msra.mxu0 0
        %384 = vmatpush.bf16.msra.mxu0 0
        %385 = vmatpush.bf16.msra.mxu0 0
        %386 = vmatpush.bf16.msra.mxu0 0
        %387 = vmatpush.bf16.msra.mxu0 0
        %388 = vmatpush.bf16.msra.mxu0 0
        %389 = vmatpush.bf16.msra.mxu0 %v380
        %390 = vmatmul.bf16.gmra.mxu0 %v377
        %v391 = vpop.f32.mrf.mxu0
        %v392 = vadd.f32 0.0, %v391
        %v393 = vpop.f32.mrf.mxu0
        %394 = vdwg.mxu0
        %v395 = vadd.f32 %v371, %v392
        %v396 = vld [vmem:[%s347 + $0x8] sm:$0xf]
        %s397 = scalar_lea.vmem %s1, 12
        %v398 = vld [vmem:[%s397] sm:$0x3]
        %v399 = vpack.c.bf16 %v396, %v396
        %v401 = vsel %vm259, %v399, 0
        %v404 = vsel %vm263, %v398, 0
        %406 = vmatpush.bf16.msra.mxu0 0
        %407 = vmatpush.bf16.msra.mxu0 0
        %408 = vmatpush.bf16.msra.mxu0 0
        %409 = vmatpush.bf16.msra.mxu0 0
        %410 = vmatpush.bf16.msra.mxu0 0
        %411 = vmatpush.bf16.msra.mxu0 0
        %412 = vmatpush.bf16.msra.mxu0 0
        %413 = vmatpush.bf16.msra.mxu0 %v404
        %414 = vmatmul.bf16.gmra.mxu0 %v401
        %v415 = vpop.f32.mrf.mxu0
        %v416 = vadd.f32 0.0, %v415
        %v417 = vpop.f32.mrf.mxu0
        %418 = vdwg.mxu0
        %v419 = vadd.f32 %v395, %v416
        %v420 = vld [vmem:[%s347 + $0xc] sm:$0xf]
        %s421 = scalar_lea.vmem %s1, 14
        %v422 = vld [vmem:[%s421] sm:$0x3]
        %v423 = vpack.c.bf16 %v420, %v420
        %v425 = vsel %vm259, %v423, 0
        %v428 = vsel %vm263, %v422, 0
        %430 = vmatpush.bf16.msra.mxu0 0
        %431 = vmatpush.bf16.msra.mxu0 0
        %432 = vmatpush.bf16.msra.mxu0 0
        %433 = vmatpush.bf16.msra.mxu0 0
        %434 = vmatpush.bf16.msra.mxu0 0
        %435 = vmatpush.bf16.msra.mxu0 0
        %436 = vmatpush.bf16.msra.mxu0 0
        %437 = vmatpush.bf16.msra.mxu0 %v428
        %438 = vmatmul.bf16.gmra.mxu0 %v425
        %v439 = vpop.f32.mrf.mxu0
        %v440 = vadd.f32 0.0, %v439
        %v441 = vpop.f32.mrf.mxu0
        %442 = vdwg.mxu0
        %v443 = vadd.f32 %v419, %v440
        %s444 = scalar_lea.vmem %s230, 32 [#allocation2]
        %v445 = vld [vmem:[%s444] sm:$0xf]
        %s446 = scalar_lea.vmem %s1, 16
        %v447 = vld [vmem:[%s446] sm:$0x3]
        %v448 = vpack.c.bf16 %v445, %v445
        %v450 = vsel %vm259, %v448, 0
        %v453 = vsel %vm263, %v447, 0
        %455 = vmatpush.bf16.msra.mxu0 0
        %456 = vmatpush.bf16.msra.mxu0 0
        %457 = vmatpush.bf16.msra.mxu0 0
        %458 = vmatpush.bf16.msra.mxu0 0
        %459 = vmatpush.bf16.msra.mxu0 0
        %460 = vmatpush.bf16.msra.mxu0 0
        %461 = vmatpush.bf16.msra.mxu0 0
        %462 = vmatpush.bf16.msra.mxu0 %v453
        %463 = vmatmul.bf16.gmra.mxu0 %v450
        %v464 = vpop.f32.mrf.mxu0
        %v465 = vadd.f32 0.0, %v464
        %v466 = vpop.f32.mrf.mxu0
        %467 = vdwg.mxu0
        %v468 = vadd.f32 %v443, %v465
        %v469 = vld [vmem:[%s444 + $0x4] sm:$0xf]
        %s470 = scalar_lea.vmem %s1, 18
        %v471 = vld [vmem:[%s470] sm:$0x3]
        %v472 = vpack.c.bf16 %v469, %v469
        %v474 = vsel %vm259, %v472, 0
        %v477 = vsel %vm263, %v471, 0
        %479 = vmatpush.bf16.msra.mxu0 0
        %480 = vmatpush.bf16.msra.mxu0 0
        %481 = vmatpush.bf16.msra.mxu0 0
        %482 = vmatpush.bf16.msra.mxu0 0
        %483 = vmatpush.bf16.msra.mxu0 0
        %484 = vmatpush.bf16.msra.mxu0 0
        %485 = vmatpush.bf16.msra.mxu0 0
        %486 = vmatpush.bf16.msra.mxu0 %v477
        %487 = vmatmul.bf16.gmra.mxu0 %v474
        %v488 = vpop.f32.mrf.mxu0
        %v489 = vadd.f32 0.0, %v488
        %v490 = vpop.f32.mrf.mxu0
        %491 = vdwg.mxu0
        %v492 = vadd.f32 %v468, %v489
        %v493 = vld [vmem:[%s444 + $0x8] sm:$0xf]
        %s494 = scalar_lea.vmem %s1, 20
        %v495 = vld [vmem:[%s494] sm:$0x3]
        %v496 = vpack.c.bf16 %v493, %v493
        %v498 = vsel %vm259, %v496, 0
        %v501 = vsel %vm263, %v495, 0
        %503 = vmatpush.bf16.msra.mxu0 0
        %504 = vmatpush.bf16.msra.mxu0 0
        %505 = vmatpush.bf16.msra.mxu0 0
        %506 = vmatpush.bf16.msra.mxu0 0
        %507 = vmatpush.bf16.msra.mxu0 0
        %508 = vmatpush.bf16.msra.mxu0 0
        %509 = vmatpush.bf16.msra.mxu0 0
        %510 = vmatpush.bf16.msra.mxu0 %v501
        %511 = vmatmul.bf16.gmra.mxu0 %v498
        %v512 = vpop.f32.mrf.mxu0
        %v513 = vadd.f32 0.0, %v512
        %v514 = vpop.f32.mrf.mxu0
        %515 = vdwg.mxu0
        %v516 = vadd.f32 %v492, %v513
        %v517 = vld [vmem:[%s444 + $0xc] sm:$0xf]
        %s518 = scalar_lea.vmem %s1, 22
        %v519 = vld [vmem:[%s518] sm:$0x3]
        %v520 = vpack.c.bf16 %v517, %v517
        %v522 = vsel %vm259, %v520, 0
        %v525 = vsel %vm263, %v519, 0
        %527 = vmatpush.bf16.msra.mxu0 0
        %528 = vmatpush.bf16.msra.mxu0 0
        %529 = vmatpush.bf16.msra.mxu0 0
        %530 = vmatpush.bf16.msra.mxu0 0
        %531 = vmatpush.bf16.msra.mxu0 0
        %532 = vmatpush.bf16.msra.mxu0 0
        %533 = vmatpush.bf16.msra.mxu0 0
        %534 = vmatpush.bf16.msra.mxu0 %v525
        %535 = vmatmul.bf16.gmra.mxu0 %v522
        %v536 = vpop.f32.mrf.mxu0
        %v537 = vadd.f32 0.0, %v536
        %v538 = vpop.f32.mrf.mxu0
        %539 = vdwg.mxu0
        %v540 = vadd.f32 %v516, %v537
        %s541 = scalar_lea.vmem %s230, 48 [#allocation2]
        %v542 = vld [vmem:[%s541] sm:$0xf]
        %s543 = scalar_lea.vmem %s1, 24
        %v544 = vld [vmem:[%s543] sm:$0x3]
        %v545 = vpack.c.bf16 %v542, %v542
        %v547 = vsel %vm259, %v545, 0
        %v550 = vsel %vm263, %v544, 0
        %552 = vmatpush.bf16.msra.mxu0 0
        %553 = vmatpush.bf16.msra.mxu0 0
        %554 = vmatpush.bf16.msra.mxu0 0
        %555 = vmatpush.bf16.msra.mxu0 0
        %556 = vmatpush.bf16.msra.mxu0 0
        %557 = vmatpush.bf16.msra.mxu0 0
        %558 = vmatpush.bf16.msra.mxu0 0
        %559 = vmatpush.bf16.msra.mxu0 %v550
        %560 = vmatmul.bf16.gmra.mxu0 %v547
        %v561 = vpop.f32.mrf.mxu0
        %v562 = vadd.f32 0.0, %v561
        %v563 = vpop.f32.mrf.mxu0
        %564 = vdwg.mxu0
        %v565 = vadd.f32 %v540, %v562
        %v566 = vld [vmem:[%s541 + $0x4] sm:$0xf]
        %s567 = scalar_lea.vmem %s1, 26
        %v568 = vld [vmem:[%s567] sm:$0x3]
        %v569 = vpack.c.bf16 %v566, %v566
        %v571 = vsel %vm259, %v569, 0
        %v574 = vsel %vm263, %v568, 0
        %576 = vmatpush.bf16.msra.mxu0 0
        %577 = vmatpush.bf16.msra.mxu0 0
        %578 = vmatpush.bf16.msra.mxu0 0
        %579 = vmatpush.bf16.msra.mxu0 0
        %580 = vmatpush.bf16.msra.mxu0 0
        %581 = vmatpush.bf16.msra.mxu0 0
        %582 = vmatpush.bf16.msra.mxu0 0
        %583 = vmatpush.bf16.msra.mxu0 %v574
        %584 = vmatmul.bf16.gmra.mxu0 %v571
        %v585 = vpop.f32.mrf.mxu0
        %v586 = vadd.f32 0.0, %v585
        %v587 = vpop.f32.mrf.mxu0
        %588 = vdwg.mxu0
        %v589 = vadd.f32 %v565, %v586
        %v590 = vld [vmem:[%s541 + $0x8] sm:$0xf]
        %s591 = scalar_lea.vmem %s1, 28
        %v592 = vld [vmem:[%s591] sm:$0x3]
        %v593 = vpack.c.bf16 %v590, %v590
        %v595 = vsel %vm259, %v593, 0
        %v598 = vsel %vm263, %v592, 0
        %600 = vmatpush.bf16.msra.mxu0 0
        %601 = vmatpush.bf16.msra.mxu0 0
        %602 = vmatpush.bf16.msra.mxu0 0
        %603 = vmatpush.bf16.msra.mxu0 0
        %604 = vmatpush.bf16.msra.mxu0 0
        %605 = vmatpush.bf16.msra.mxu0 0
        %606 = vmatpush.bf16.msra.mxu0 0
        %607 = vmatpush.bf16.msra.mxu0 %v598
        %608 = vmatmul.bf16.gmra.mxu0 %v595
        %v609 = vpop.f32.mrf.mxu0
        %v610 = vadd.f32 0.0, %v609
        %v611 = vpop.f32.mrf.mxu0
        %612 = vdwg.mxu0
        %v613 = vadd.f32 %v589, %v610
        %v614 = vld [vmem:[%s541 + $0xc] sm:$0xf]
        %s615 = scalar_lea.vmem %s1, 30
        %v616 = vld [vmem:[%s615] sm:$0x3]
        %v617 = vpack.c.bf16 %v614, %v614
        %v619 = vsel %vm259, %v617, 0
        %v622 = vsel %vm263, %v616, 0
        %624 = vmatpush.bf16.msra.mxu0 0
        %625 = vmatpush.bf16.msra.mxu0 0
        %626 = vmatpush.bf16.msra.mxu0 0
        %627 = vmatpush.bf16.msra.mxu0 0
        %628 = vmatpush.bf16.msra.mxu0 0
        %629 = vmatpush.bf16.msra.mxu0 0
        %630 = vmatpush.bf16.msra.mxu0 0
        %631 = vmatpush.bf16.msra.mxu0 %v622
        %632 = vmatmul.bf16.gmra.mxu0 %v619
        %v633 = vpop.f32.mrf.mxu0
        %v634 = vadd.f32 0.0, %v633
        %v635 = vpop.f32.mrf.mxu0
        %636 = vdwg.mxu0
        %v637 = vadd.f32 %v613, %v634
        %v638 = vld [vmem:[%s2] sm:$0x1]
        %v640 = vperm.slane %v638, 0
        %v642 = vadd.f32 %v637, %v640
        %vm643 = vcmask 257024
        %644 = vst.msk [vmem:[%s250] sm:$0xf] %vm643, %v642
        %s645 = sand.u32 %s109, 1
        %s646 = scalar_lea.sflag [#allocation4], %s645
        %s647 = sand.u32 %s109, 1
        %s648 = smul.addr %s647, 4
        %s649 = scalar_lea.vmem [#allocation3], %s648
        // Predicated region
        $region71: #{tpu_custom_call.1} parent=65 // pred_check
          %p650 = pneg %p119
        $region72: #{tpu_custom_call.1} parent=65 // pred_check_branch
          %652 = sbr.rel (%p650) target = $region74
        $region73: #{tpu_custom_call.1} parent=65 // pred_region
          %654 = vsyncadd %s646, 0
          %s655 = smul.addr %s21, 4
          %s656 = sadd.s32 %s22, %s655
          %s657 = smul.addr %s656, 4
          %s658 = scalar_lea.hbm %s3, %s657
          %s660 = sshll.u32 %s649, 4
          %s661 = int_to_ptr.vmem [resolvable:$true] %s660
          %s662 = sshll.u32 %s658, 4
          %s663 = int_to_ptr.hbm [resolvable:$true] %s662
          %665 = dma.vmem_to_hbm [thread:$0]  %s661, 64, %s663, %s646
        $region74: #{tpu_custom_call.1} parent=65 // pred_fallthru
          _
      $region66: #{tpu_custom_call.1} parent=5 // pred_fallthru
        _
      %p666 = scmp.le.s32.totalorder 2, %s12
      // Predicated region
      $region75: #{tpu_custom_call.1} parent=5 // pred_check
        %p667 = pneg %p666
      $region76: #{tpu_custom_call.1} parent=5 // pred_check_branch
        %669 = sbr.rel (%p667) target = $region78
      $region77: #{tpu_custom_call.1} parent=5 // pred_region
        %s670 = ssub.s32 %s12, 2
        // Predicated region
        $region79: #{tpu_custom_call.1} parent=77 // pred_check
          %p671 = pneg %p125
        $region80: #{tpu_custom_call.1} parent=77 // pred_check_branch
          %673 = sbr.rel (%p671) target = $region82
        $region81: #{tpu_custom_call.1} parent=77 // pred_region
          %s674 = sand.u32 %s110, 1
          %s675 = scalar_lea.sflag [#allocation4], %s674
          %s676 = sand.u32 %s110, 1
          %s677 = smul.addr %s676, 4
          %s678 = scalar_lea.vmem [#allocation3], %s677
          %680 = dma.done %s675, 64
        $region82: #{tpu_custom_call.1} parent=77 // pred_fallthru
          _
      $region78: #{tpu_custom_call.1} parent=5 // pred_fallthru
        _
    $region6: #{tpu_custom_call.1} parent=1 // loop_footer
      %s16 = sadd.s32 1, %s12
    $region7: #{tpu_custom_call.1} parent=1 // loop_footer_branch
      %11 = sbr.rel target = $region3
    $region8: #{tpu_custom_call.1} parent=1 // loop_exit
      _
    %681 = vsyncpa [#allocation4], 1
    %s682 = scalar_lea.sflag [#allocation4], 1
    %683 = vsyncpa %s682, 1

</llo_original>
